<compile_context>
chip_gen: v6e
topology: v6e:2x2x1
jax: 0.10.0
libtpu: 0.0.40
codegen_flags: <defaults>
</compile_context>

<pallas_src>
import functools

import jax
import jax.numpy as jnp
import numpy as np
from jax.experimental import pallas as pl
from jax.experimental.pallas import tpu as pltpu

_MASK_VALUE = -0.7 * float(np.finfo(np.float32).max)


# ----------------------------------------------------------------------------
# helpers
# ----------------------------------------------------------------------------
def _pad_axis(x, axis, mult):
    size = x.shape[axis]
    pad = (-size) % mult
    if pad == 0:
        return x
    widths = [(0, 0)] * x.ndim
    widths[axis] = (0, pad)
    return jnp.pad(x, widths)


def _attn_tile(s, target):
    if s <= target:
        return s                      # full-extent block, always legal
    return max(8, (target // 8) * 8)  # keep second-minor dim 8-aligned


# ----------------------------------------------------------------------------
# Tiled matmul (the to_q / to_k / to_v Linear layers, bias=False by default)
# ----------------------------------------------------------------------------
def _matmul_kernel(x_ref, w_ref, o_ref, acc_ref, *, scale):
    k = pl.program_id(2)

    @pl.when(k == 0)
    def _():
        acc_ref[...] = jnp.zeros_like(acc_ref)

    acc_ref[...] += jnp.dot(x_ref[...], w_ref[...],
                            preferred_element_type=jnp.float32)

    @pl.when(k == pl.num_programs(2) - 1)
    def _():
        acc = acc_ref[...]
        if scale != 1.0:              # static: softmax_scale folded in epilogue
            acc = acc * scale
        o_ref[...] = acc.astype(o_ref.dtype)


def _matmul_bias_kernel(x_ref, w_ref, b_ref, o_ref, acc_ref, *, scale):
    k = pl.program_id(2)

    @pl.when(k == 0)
    def _():
        acc_ref[...] = jnp.zeros_like(acc_ref)

    acc_ref[...] += jnp.dot(x_ref[...], w_ref[...],
                            preferred_element_type=jnp.float32)

    @pl.when(k == pl.num_programs(2) - 1)
    def _():
        acc = acc_ref[...] + b_ref[...]       # bias only in the epilogue
        if scale != 1.0:
            acc = acc * scale
        o_ref[...] = acc.astype(o_ref.dtype)


def linear_pallas(x2d, w, b=None, *, tm=512, tn=512, tk=1024,
                  compute_dtype=None, out_dtype=None, scale=None):
    """out = scale * (x2d @ w (+ b)).  x2d: (M, K), w: (K, N) (in, out) layout."""
    M, K = x2d.shape
    K2, N = w.shape
    assert K == K2
    if out_dtype is None:
        out_dtype = compute_dtype if compute_dtype is not None else x2d.dtype
    scale = 1.0 if scale is None else float(scale)

    if compute_dtype is not None:     # bf16 MXU operands + bf16 HBM streaming
        x2d = x2d.astype(compute_dtype)
        w = w.astype(compute_dtype)

    # Tile targets collapse to the full dim when the dim is small, so the
    # (8, 128) block constraint is met either by alignment or full extent.
    tm = M if M <= tm else tm
    tn = N if N <= tn else tn
    tk = K if K <= tk else tk

    x2d = _pad_axis(_pad_axis(x2d, 0, tm), 1, tk)
    w = _pad_axis(_pad_axis(w, 0, tk), 1, tn)
    Mp, Kp = x2d.shape
    _, Np = w.shape
    grid = (Mp // tm, Np // tn, Kp // tk)

    in_specs = [
        pl.BlockSpec((tm, tk), lambda i, j, k: (i, k)),
        pl.BlockSpec((tk, tn), lambda i, j, k: (k, j)),
    ]
    operands = (x2d, w)
    kernel = functools.partial(_matmul_kernel, scale=scale)
    if b is not None:
        b2 = _pad_axis(b.reshape(1, N).astype(jnp.float32), 1, tn)
        in_specs.append(pl.BlockSpec((1, tn), lambda i, j, k: (0, j)))
        operands = (x2d, w, b2)
        kernel = functools.partial(_matmul_bias_kernel, scale=scale)

    in_bytes = jnp.dtype(x2d.dtype).itemsize
    out = pl.pallas_call(
        kernel,
        out_shape=jax.ShapeDtypeStruct((Mp, Np), out_dtype),
        grid_spec=pltpu.PrefetchScalarGridSpec(
            num_scalar_prefetch=0,
            grid=grid,
            in_specs=in_specs,
            out_specs=pl.BlockSpec((tm, tn), lambda i, j, k: (i, j)),
            scratch_shapes=[pltpu.VMEM((tm, tn), jnp.float32)],
        ),
        compiler_params=pltpu.CompilerParams(
            dimension_semantics=("parallel", "parallel", "arbitrary")),
        cost_estimate=pl.CostEstimate(
            flops=2 * Mp * Kp * Np,
            transcendentals=0,
            bytes_accessed=(Mp * Kp + Kp * Np) * in_bytes
            + Mp * Np * jnp.dtype(out_dtype).itemsize),
    )(*operands)

    if (Mp, Np) != (M, N):
        out = out[:M, :N]
    return out


# ----------------------------------------------------------------------------
# Flash-attention forward (online softmax), grid = (batch*heads, q, kv)
# ----------------------------------------------------------------------------
def _flash_fwd_kernel(q_ref, k_ref, v_ref, o_ref, m_sc, l_sc, acc_sc, *,
                      scale, causal, tq, tkv, kv_len):
    qi = pl.program_id(1)
    kv = pl.program_id(2)

    @pl.when(kv == 0)
    def _():
        m_sc[...] = jnp.full_like(m_sc, -jnp.inf)
        l_sc[...] = jnp.zeros_like(l_sc)
        acc_sc[...] = jnp.zeros_like(acc_sc)

    def body():
        q = q_ref[0]                   # native (bf16) MXU operand, no f32 cast
        if scale != 1.0:               # static; normally folded into to_q
            q = q * scale
        s = jax.lax.dot_general(q, k_ref[0], (((1,), (1,)), ((), ())),
                                preferred_element_type=jnp.float32)  # (tq,tkv)

        if causal or (kv_len is not None):
            k_idx = kv * tkv + jax.lax.broadcasted_iota(jnp.int32, (tq, tkv), 1)
            mask = None
            if kv_len is not None:     # Skv was padded: mask padded keys
                mask = k_idx < kv_len
            if causal:
                q_idx = qi * tq + jax.lax.broadcasted_iota(
                    jnp.int32, (tq, tkv), 0)
                c = q_idx >= k_idx
                mask = c if mask is None else (mask & c)
            s = jnp.where(mask, s, _MASK_VALUE)   # finite: no NaN in alpha

        m_prev = m_sc[...]
        m_new = jnp.maximum(m_prev, s.max(axis=-1, keepdims=True))
        alpha = jnp.exp(m_prev - m_new)
        p = jnp.exp(s - m_new)
        l_sc[...] = alpha * l_sc[...] + p.sum(axis=-1, keepdims=True)
        acc_sc[...] = alpha * acc_sc[...] + jnp.dot(
            p.astype(v_ref.dtype), v_ref[0], preferred_element_type=jnp.float32)
        m_sc[...] = m_new

    if causal:
        # Skip kv tiles that lie entirely above the diagonal (MXU/EUP savings).
        run = (qi * tq + (tq - 1)) >= (kv * tkv)
        pl.when(run)(body)
    else:
        body()

    @pl.when(kv == pl.num_programs(2) - 1)
    def _():
        inv_l = pl.reciprocal(l_sc[...], approx=True)
        o_ref[0] = (acc_sc[...] * inv_l).astype(o_ref.dtype)


def flash_attention_pallas(q, k, v, *, softmax_scale=None, causal=False,
                           tq=512, tkv=1024):
    """q: (BH, Sq, D), k/v: (BH, Skv, D)  ->  (BH, Sq, D)."""
    BH, Sq, D = q.shape
    _, Skv, _ = k.shape
    scale = (float(softmax_scale) if softmax_scale is not None
             else 1.0 / float(np.sqrt(D)))
    out_dtype = q.dtype

    tq = _attn_tile(Sq, tq)
    tkv = _attn_tile(Skv, tkv)

    # Pad awkward lengths up to a tile multiple (never a full-sequence block).
    Sq_p = ((Sq + tq - 1) // tq) * tq
    Skv_p = ((Skv + tkv - 1) // tkv) * tkv
    if Sq_p != Sq:
        q = _pad_axis(q, 1, tq)
    if Skv_p != Skv:
        k = _pad_axis(k, 1, tkv)
        v = _pad_axis(v, 1, tkv)
    kv_len = Skv if Skv_p != Skv else None

    kernel = functools.partial(_flash_fwd_kernel, scale=scale, causal=causal,
                               tq=tq, tkv=tkv, kv_len=kv_len)
    itemsize = jnp.dtype(q.dtype).itemsize
    out = pl.pallas_call(
        kernel,
        out_shape=jax.ShapeDtypeStruct((BH, Sq_p, D), out_dtype),
        grid_spec=pltpu.PrefetchScalarGridSpec(
            num_scalar_prefetch=0,
            grid=(BH, Sq_p // tq, Skv_p // tkv),
            in_specs=[
                pl.BlockSpec((1, tq, D), lambda b, i, j: (b, i, 0)),
                pl.BlockSpec((1, tkv, D), lambda b, i, j: (b, j, 0)),
                pl.BlockSpec((1, tkv, D), lambda b, i, j: (b, j, 0)),
            ],
            out_specs=pl.BlockSpec((1, tq, D), lambda b, i, j: (b, i, 0)),
            scratch_shapes=[
                pltpu.VMEM((tq, 1), jnp.float32),   # running max
                pltpu.VMEM((tq, 1), jnp.float32),   # running denom
                pltpu.VMEM((tq, D), jnp.float32),   # output accumulator
            ],
        ),
        compiler_params=pltpu.CompilerParams(
            dimension_semantics=("parallel", "parallel", "arbitrary")),
        cost_estimate=pl.CostEstimate(
            flops=4 * BH * Sq_p * Skv_p * D,
            transcendentals=BH * Sq_p * Skv_p,
            bytes_accessed=(BH * (2 * Sq_p + 2 * Skv_p) * D) * itemsize),
    )(q, k, v)

    if Sq_p != Sq:
        out = out[:, :Sq, :]
    return out


# ----------------------------------------------------------------------------
# Full module forward
# ----------------------------------------------------------------------------
def multihead_attention_flash_v2(q, k, v, wq, wk, wv, n_head, *,
                                 softmax_scale=None, causal=False,
                                 compute_dtype=jnp.bfloat16,
                                 attn_tq=512, attn_tkv=1024):
    """JAX/Pallas equivalent of MultiheadAttentionFlashV2.forward (default path).

    q: (Sq, B, E), k/v: (Skv, B, E); wq/wk/wv: (E, E) in (in, out) layout
    (already transposed vs. torch nn.Linear weight).  Returns (r_out,).
    """
    Sq, B, E = q.shape
    Skv = k.shape[0]
    h = n_head
    d = E // h
    assert h * d == E
    out_dtype = q.dtype
    scale = (float(softmax_scale) if softmax_scale is not None
             else 1.0 / float(np.sqrt(d)))

    def flat(x, S):                    # (S, B, E) -> (B*S, E)
        return jnp.transpose(x, (1, 0, 2)).reshape(B * S, E)

    def to_heads(x2d, S):              # (B*S, E) -> (B*h, S, d)
        return (x2d.reshape(B, S, h, d)
                .transpose(0, 2, 1, 3)
                .reshape(B * h, S, d))

    if (q is k) and (k is v):
        # Self-attention: fuse the three projections into one matmul so the
        # activation streams from HBM once; fold softmax scale into wq.
        w_all = jnp.concatenate([wq * scale, wk, wv], axis=1)   # (E, 3E)
        qkv = linear_pallas(flat(q, Sq), w_all, compute_dtype=compute_dtype)
        qb, kb, vb = qkv[:, :E], qkv[:, E:2 * E], qkv[:, 2 * E:]
        Skv_eff = Sq
    else:
        qb = linear_pallas(flat(q, Sq), wq, compute_dtype=compute_dtype,
                           scale=scale)                 # scale in the epilogue
        kb = linear_pallas(flat(k, Skv), wk, compute_dtype=compute_dtype)
        vb = linear_pallas(flat(v, Skv), wv, compute_dtype=compute_dtype)
        Skv_eff = Skv

    qh = to_heads(qb, Sq)
    kh = to_heads(kb, Skv_eff)
    vh = to_heads(vb, Skv_eff)

    # softmax_scale already folded into the q projection -> pass 1.0 here.
    o = flash_attention_pallas(qh, kh, vh, softmax_scale=1.0, causal=causal,
                               tq=attn_tq, tkv=attn_tkv)        # (B*h, Sq, d)

    # merge heads: (B*h, Sq, d) -> (B, Sq, E) -> (Sq, B, E)
    r = (o.reshape(B, h, Sq, d)
         .transpose(0, 2, 1, 3)
         .reshape(B, Sq, E))
    r = jnp.transpose(r, (1, 0, 2)).astype(out_dtype)
    return (r,)


# ----------------------------------------------------------------------------
# Pure-JAX reference
# ----------------------------------------------------------------------------
def _reference_mha(q, k, v, wq, wk, wv, n_head, softmax_scale=None,
                   causal=False):
    Sq, B, E = q.shape
    Skv = k.shape[0]
    h = n_head
    d = E // h
    qb = jnp.transpose(q, (1, 0, 2)) @ wq
    kb = jnp.transpose(k, (1, 0, 2)) @ wk
    vb = jnp.transpose(v, (1, 0, 2)) @ wv

    def heads(x, S):
        return x.reshape(B, S, h, d).transpose(0, 2, 1, 3)

    qh, kh, vh = heads(qb, Sq), heads(kb, Skv), heads(vb, Skv)
    scale = (softmax_scale if softmax_scale is not None else 1.0 / np.sqrt(d))
    s = jnp.einsum("bhqd,bhkd->bhqk", qh, kh) * scale
    if causal:
        mask = jnp.tril(jnp.ones((Sq, Skv), dtype=bool))
        s = jnp.where(mask, s, -jnp.inf)
    p = jax.nn.softmax(s, axis=-1)
    o = jnp.einsum("bhqk,bhkd->bhqd", p, vh)
    o = o.transpose(0, 2, 1, 3).reshape(B, Sq, E)
    return jnp.transpose(o, (1, 0, 2))


if __name__ == "__main__":
    batch, embed_dim, n_head = 2, 32, 4
    key = jax.random.PRNGKey(0)
    kq, kk, kv_, kwq, kwk, kwv = jax.random.split(key, 6)
    wscale = 1.0 / np.sqrt(embed_dim)
    wq = jax.random.normal(kwq, (embed_dim, embed_dim), jnp.float32) * wscale
    wk = jax.random.normal(kwk, (embed_dim, embed_dim), jnp.float32) * wscale
    wv = jax.random.normal(kwv, (embed_dim, embed_dim), jnp.float32) * wscale

    def check(out, ref, name, tol):
        out = jax.block_until_ready(out)
        assert out.shape == ref.shape, (name, out.shape, ref.shape)
        err = float(jnp.max(jnp.abs(out.astype(jnp.float32) - ref)))
        assert err < tol, (name, err)

    # 1) cross-attention, separate bf16 projections, single-tile attention.
    seq = 8
    q = jax.random.normal(kq, (seq, batch, embed_dim), jnp.float32)
    k = jax.random.normal(kk, (seq, batch, embed_dim), jnp.float32)
    v = jax.random.normal(kv_, (seq, batch, embed_dim), jnp.float32)
    (out,) = multihead_attention_flash_v2(q, k, v, wq, wk, wv, n_head)
    check(out, _reference_mha(q, k, v, wq, wk, wv, n_head), "cross", 1e-1)

    # 2) self-attention (fused QKV projection) with causal mask.
    (out,) = multihead_attention_flash_v2(q, q, q, wq, wk, wv, n_head,
                                          causal=True)
    check(out, _reference_mha(q, q, q, wq, wk, wv, n_head, causal=True),
          "self_causal", 1e-1)

    # 3) multi-kv-tile + padded (non-multiple) lengths, f32 fallback path.
    sq3, skv3 = 40, 80
    q3 = jax.random.normal(jax.random.fold_in(key, 3),
                           (sq3, batch, embed_dim), jnp.float32)
    k3 = jax.random.normal(jax.random.fold_in(key, 4),
                           (skv3, batch, embed_dim), jnp.float32)
    v3 = jax.random.normal(jax.random.fold_in(key, 5),
                           (skv3, batch, embed_dim), jnp.float32)
    (out,) = multihead_attention_flash_v2(q3, k3, v3, wq, wk, wv, n_head,
                                          compute_dtype=jnp.float32,
                                          attn_tq=16, attn_tkv=32)
    check(out, _reference_mha(q3, k3, v3, wq, wk, wv, n_head),
          "multi_tile_padded_f32", 2e-2)

    # 4) multi-tile causal self-attention (exercises masked-tile skipping).
    s4 = 64
    q4 = jax.random.normal(jax.random.fold_in(key, 6),
                           (s4, batch, embed_dim), jnp.float32)
    (out,) = multihead_attention_flash_v2(q4, q4, q4, wq, wk, wv, n_head,
                                          causal=True, attn_tq=16, attn_tkv=16)
    check(out, _reference_mha(q4, q4, q4, wq, wk, wv, n_head, causal=True),
          "causal_multi_tile", 1e-1)

    print("KERNEL_OK")
</pallas_src>

<mosaic_0001>
module attributes {stable_mosaic.version = 11 : i64} {
  func.func @_matmul_kernel(%arg0: i32, %arg1: i32, %arg2: i32, %arg3: memref<16x32xbf16, #tpu.memory_space<vmem>>, %arg4: memref<32x32xbf16, #tpu.memory_space<vmem>>, %arg5: memref<16x32xbf16, #tpu.memory_space<vmem>>, %arg6: memref<16x32xf32, #tpu.memory_space<vmem>>) attributes {dimension_semantics = [#tpu.dimension_semantics<parallel>, #tpu.dimension_semantics<parallel>, #tpu.dimension_semantics<arbitrary>], iteration_bounds = array<i64: 1, 1, 1>, scalar_prefetch = 0 : i64, scratch_operands = 1 : i64, tpu.core_type = #tpu.core_type<tc>, window_params = [{transform_indices = @transform_0, window_bounds = array<i64: 16, 32>}, {transform_indices = @transform_1, window_bounds = array<i64: 32, 32>}, {transform_indices = @transform_2, window_bounds = array<i64: 16, 32>}]} {
    %c0_i32 = arith.constant 0 : i32
    %0 = arith.cmpi eq, %arg2, %c0_i32 : i32
    %1 = arith.extui %0 : i1 to i32
    %c0_i32_0 = arith.constant 0 : i32
    %2 = arith.cmpi ne, %1, %c0_i32_0 : i32
    scf.if %2 {
      %cst_10 = arith.constant 0.000000e+00 : f32
      %12 = vector.broadcast %cst_10 : f32 to vector<16x32xf32>
      %c0_11 = arith.constant 0 : index
      %c0_12 = arith.constant 0 : index
      %13 = vector.load %arg6[%c0_11, %c0_12] : memref<16x32xf32, #tpu.memory_space<vmem>>, vector<16x32xf32>
      tpu.vector_store %arg6[%c0_11, %c0_12], %12 {strides = array<i32>} : memref<16x32xf32, #tpu.memory_space<vmem>>, vector<16x32xf32>,
    } else {
    }
    %c0 = arith.constant 0 : index
    %c0_1 = arith.constant 0 : index
    %3 = vector.load %arg6[%c0, %c0_1] : memref<16x32xf32, #tpu.memory_space<vmem>>, vector<16x32xf32>
    %c0_2 = arith.constant 0 : index
    %c0_3 = arith.constant 0 : index
    %4 = vector.load %arg3[%c0_2, %c0_3] : memref<16x32xbf16, #tpu.memory_space<vmem>>, vector<16x32xbf16>
    %c0_4 = arith.constant 0 : index
    %c0_5 = arith.constant 0 : index
    %5 = vector.load %arg4[%c0_4, %c0_5] : memref<32x32xbf16, #tpu.memory_space<vmem>>, vector<32x32xbf16>
    %cst = arith.constant dense<0.000000e+00> : vector<16x32xf32>
    %6 = tpu.matmul %4, %5, %cst {dimension_numbers = #tpu.dot_dimension_numbers<[1], [0], [0], [1], [0, 0, 1, 1], [], []>} : vector<16x32xbf16>, vector<32x32xbf16>, vector<16x32xf32> -> vector<16x32xf32>
    %7 = arith.addf %3, %6 : vector<16x32xf32>
    %c0_6 = arith.constant 0 : index
    %c0_7 = arith.constant 0 : index
    %8 = vector.load %arg6[%c0_6, %c0_7] : memref<16x32xf32, #tpu.memory_space<vmem>>, vector<16x32xf32>
    tpu.vector_store %arg6[%c0_6, %c0_7], %7 {strides = array<i32>} : memref<16x32xf32, #tpu.memory_space<vmem>>, vector<16x32xf32>,
    %c0_i32_8 = arith.constant 0 : i32
    %9 = arith.cmpi eq, %arg2, %c0_i32_8 : i32
    %10 = arith.extui %9 : i1 to i32
    %c0_i32_9 = arith.constant 0 : i32
    %11 = arith.cmpi ne, %10, %c0_i32_9 : i32
    scf.if %11 {
      %c0_10 = arith.constant 0 : index
      %c0_11 = arith.constant 0 : index
      %12 = vector.load %arg6[%c0_10, %c0_11] : memref<16x32xf32, #tpu.memory_space<vmem>>, vector<16x32xf32>
      %cst_12 = arith.constant 0.353553385 : f32
      %13 = vector.broadcast %cst_12 : f32 to vector<16x32xf32>
      %14 = arith.mulf %12, %13 : vector<16x32xf32>
      %15 = arith.truncf %14 : vector<16x32xf32> to vector<16x32xbf16>
      %c0_13 = arith.constant 0 : index
      %c0_14 = arith.constant 0 : index
      %16 = vector.load %arg5[%c0_13, %c0_14] : memref<16x32xbf16, #tpu.memory_space<vmem>>, vector<16x32xbf16>
      tpu.vector_store %arg5[%c0_13, %c0_14], %15 {strides = array<i32>} : memref<16x32xbf16, #tpu.memory_space<vmem>>, vector<16x32xbf16>,
    } else {
    }
    return
  }
  func.func @transform_0(%arg0: i32, %arg1: i32, %arg2: i32) -> (i32, i32) {
    %c0_i32 = arith.constant 0 : i32
    return %arg0, %arg2 : i32, i32
  }
  func.func @transform_1(%arg0: i32, %arg1: i32, %arg2: i32) -> (i32, i32) {
    %c0_i32 = arith.constant 0 : i32
    return %arg2, %arg1 : i32, i32
  }
  func.func @transform_2(%arg0: i32, %arg1: i32, %arg2: i32) -> (i32, i32) {
    %c0_i32 = arith.constant 0 : i32
    return %arg0, %arg1 : i32, i32
  }
}

</mosaic_0001>

<llo_original>
// kernel: tpu_custom_call.1
$region0: #{tpu_custom_call.1}
  #allocation0 [shape = 'u32[]', space=smem, size = 0x4, offset = 0x4, fixed_abs, tag = 'smem constant byte address 0x4 - core index']
  #allocation1 [shape = 'u32[144,128]{1,0:T(1,128)}', space=vmem, size = 0x12000, scoped, tag = 'internal scratch']
  #allocation2 [shape = 'f32[16,32]{1,0:T(8,128)}', space=vmem, size = 0x2000, scoped, tag = 'scratch operand']
  %s0 = inlined_call_operand.hbm [shape: bf16[16,32], index: 0, kind: input, shape index: {}]
  %s1 = inlined_call_operand.hbm [shape: bf16[32,32], index: 1, kind: input, shape index: {}]
  %s2 = inlined_call_operand.hbm [shape: bf16[16,32], index: 2, kind: output, shape index: {}]
  %s3 = sld [smem:[#allocation0]]
  $region34: #{tpu_custom_call.1} parent=0
    _
  %s5 = ssub.s32 1, %s3
  %s6 = scalar_select 0, %s5, %s3
  $region1: #{tpu_custom_call.1} parent=0
    #allocation3 [shape = 'u8[4096]{0}', space=vmem, size = 0x1000, scoped, tag = 'input window, operand 0, single buffered']
    #allocation4 [shape = 's32[1]{0}', space=sflag, size = 0x4, scoped, tag = 'scoped memory for tpu_custom_call.1']
    #allocation5 [shape = 's32[1]{0}', space=sflag, size = 0x4, scoped, tag = 'scoped memory for tpu_custom_call.1']
    #allocation6 [shape = 'u8[8192]{0}', space=vmem, size = 0x2000, scoped, tag = 'input window, operand 1, single buffered']
    #allocation7 [shape = 's32[1]{0}', space=sflag, size = 0x4, scoped, tag = 'scoped memory for tpu_custom_call.1']
    #allocation8 [shape = 'u8[4096]{0}', space=vmem, size = 0x1000, scoped, tag = 'output window, operand 0, single buffered']
    %7 = vsyncpa [#allocation4], 0
    %8 = vsyncpa [#allocation7], 0
    %9 = vsyncpa [#allocation5], 0
    // Predicated region
    $region2: #{tpu_custom_call.1} parent=1 // pred_check
      _
    $region3: #{tpu_custom_call.1} parent=1 // pred_check_branch
      %11 = sbr.rel (0) target = $region5
    $region4: #{tpu_custom_call.1} parent=1 // pred_region
      %s13 = ssub.s32 128, 128
      %14 = vsyncadd [#allocation4], %s13
      %s15 = sshll.u32 [#allocation3], 4
      %s16 = int_to_ptr.vmem [resolvable:$true] %s15
      %21 = dma.hbm_to_vmem [thread:$0]  %s0, 128, %s16, [#allocation4], 64, 64, 4
    $region5: #{tpu_custom_call.1} parent=1 // pred_fallthru
      _
    // Predicated region
    $region6: #{tpu_custom_call.1} parent=1 // pred_check
      _
    $region7: #{tpu_custom_call.1} parent=1 // pred_check_branch
      %23 = sbr.rel (0) target = $region9
    $region8: #{tpu_custom_call.1} parent=1 // pred_region
      %s25 = ssub.s32 256, 256
      %26 = vsyncadd [#allocation7], %s25
      %s27 = sshll.u32 [#allocation6], 4
      %s28 = int_to_ptr.vmem [resolvable:$true] %s27
      %33 = dma.hbm_to_vmem [thread:$0]  %s1, 256, %s28, [#allocation7], 64, 64, 4
    $region9: #{tpu_custom_call.1} parent=1 // pred_fallthru
      _
    // Predicated region
    $region10: #{tpu_custom_call.1} parent=1 // pred_check
      _
    $region11: #{tpu_custom_call.1} parent=1 // pred_check_branch
      %35 = sbr.rel (0) target = $region13
    $region12: #{tpu_custom_call.1} parent=1 // pred_region
      %36 = dma.done [#allocation4], 128
    $region13: #{tpu_custom_call.1} parent=1 // pred_fallthru
      _
    // Predicated region
    $region14: #{tpu_custom_call.1} parent=1 // pred_check
      _
    $region15: #{tpu_custom_call.1} parent=1 // pred_check_branch
      %38 = sbr.rel (0) target = $region17
    $region16: #{tpu_custom_call.1} parent=1 // pred_region
      %39 = dma.done [#allocation7], 256
    $region17: #{tpu_custom_call.1} parent=1 // pred_fallthru
      _
    %p41 = scmp.eq.s32.totalorder 0, 0
    // Predicated region
    $region18: #{tpu_custom_call.1} parent=1 // pred_check
      %p42 = pneg %p41
    $region19: #{tpu_custom_call.1} parent=1 // pred_check_branch
      %44 = sbr.rel (%p42) target = $region21
    $region20: #{tpu_custom_call.1} parent=1 // pred_region
      %vm45 = vcmask 261120
      %46 = vst.msk [vmem:[#allocation2] sm:$0xff] %vm45, 0.0
      %47 = vst.msk [vmem:[#allocation2 + $0x8] sm:$0xff] %vm45, 0.0
    $region21: #{tpu_custom_call.1} parent=1 // pred_fallthru
      _
    %v48 = vld [vmem:[#allocation2] sm:$0xff]
    %v49 = vld [vmem:[#allocation2 + $0x8] sm:$0xff]
    %v50 = vld [vmem:[#allocation3] sm:$0xf]
    %v51 = vld [vmem:[#allocation3 + $0x4] sm:$0xf]
    %v52 = vld [vmem:[#allocation6] sm:$0xf]
    %v53 = vld [vmem:[#allocation6 + $0x4] sm:$0xf]
    %v54 = vld [vmem:[#allocation6 + $0x8] sm:$0xf]
    %v55 = vld [vmem:[#allocation6 + $0xc] sm:$0xf]
    %v58 = vunpack.c.l.b16 %v50
    %v59 = vunpack.c.l.b16 %v51
    %v60 = vpack.c.b16 %v59, %v58
    %v65 = vunpack.c.l.b16 %v52
    %v66 = vunpack.c.l.b16 %v53
    %v67 = vunpack.c.l.b16 %v54
    %v68 = vunpack.c.l.b16 %v55
    %v69 = vpack.c.b16 %v66, %v65
    %v70 = vpack.c.b16 %v68, %v67
    %vm73 = vcmask 261120
    %v75 = vsel %vm73, %v60, 0
    %77 = vmatprep.subr.bf16.mxu0 0
    %78 = vmatpush1.bf16.msra.mxu0 0
    %79 = vmatprep.subr.bf16.mxu0 0
    %80 = vmatpush1.bf16.msra.mxu0 0
    %81 = vmatprep.subr.bf16.mxu0 0
    %82 = vmatpush1.bf16.msra.mxu0 0
    %83 = vmatprep.subr.bf16.mxu0 0
    %84 = vmatpush1.bf16.msra.mxu0 0
    %85 = vmatprep.subr.bf16.mxu0 0
    %86 = vmatpush1.bf16.msra.mxu0 0
    %87 = vmatprep.subr.bf16.mxu0 0
    %88 = vmatpush1.bf16.msra.mxu0 0
    %89 = vmatprep.subr.bf16.mxu0 0
    %90 = vmatpush1.bf16.msra.mxu0 %v70
    %91 = vmatprep.subr.bf16.mxu0 0
    %92 = vmatpush1.bf16.msra.mxu0 %v69
    %93 = vmatprep.subr.bf16.mxu0 0
    %94 = vmatpush2.bf16.msra.mxu0 0
    %95 = vmatprep.subr.bf16.mxu0 0
    %96 = vmatpush2.bf16.msra.mxu0 0
    %97 = vmatprep.subr.bf16.mxu0 0
    %98 = vmatpush2.bf16.msra.mxu0 0
    %99 = vmatprep.subr.bf16.mxu0 0
    %100 = vmatpush2.bf16.msra.mxu0 0
    %101 = vmatprep.subr.bf16.mxu0 0
    %102 = vmatpush2.bf16.msra.mxu0 0
    %103 = vmatprep.subr.bf16.mxu0 0
    %104 = vmatpush2.bf16.msra.mxu0 0
    %105 = vmatprep.subr.bf16.mxu0 0
    %106 = vmatpush2.bf16.msra.mxu0 0
    %107 = vmatprep.subr.bf16.mxu0 0
    %108 = vmatpush2.bf16.msra.mxu0 0
    %109 = vmatprep.mubr.bf16.mxu0 0
    %110 = vmatmul.mubr.bf16.gmra.mxu0 %v75
    %v111 = vpop.f32.mrf.mxu0
    %v112 = vadd.f32 0.0, %v111
    %v113 = vpop.f32.mrf.mxu0
    %v114 = vpop.f32.mrf.mxu0
    %v115 = vadd.f32 0.0, %v114
    %v116 = vpop.f32.mrf.mxu0
    %117 = vdwg.mxu0
    %v118 = vadd.f32 %v48, %v112
    %v119 = vadd.f32 %v49, %v115
    %120 = vst.msk [vmem:[#allocation2] sm:$0xff] %vm73, %v118
    %121 = vst.msk [vmem:[#allocation2 + $0x8] sm:$0xff] %vm73, %v119
    // Predicated region
    $region22: #{tpu_custom_call.1} parent=1 // pred_check
      %p122 = pneg %p41
    $region23: #{tpu_custom_call.1} parent=1 // pred_check_branch
      %124 = sbr.rel (%p122) target = $region25
    $region24: #{tpu_custom_call.1} parent=1 // pred_region
      %v125 = vld [vmem:[#allocation2] sm:$0xff]
      %v126 = vld [vmem:[#allocation2 + $0x8] sm:$0xff]
      %v127 = vmul.f32 %v125, 0.35355338
      %v128 = vmul.f32 %v126, 0.35355338
      %v129 = vpack.c.bf16 %v128, %v127
      %v131 = vunpack.c.l.b16 %v129
      %v132 = vunpack.c.h.b16 %v129
      %v133 = vpack.c.b16 %v131, %v131
      %v134 = vpack.c.b16 %v132, %v132
      %vm137 = vcmask 257024
      %138 = vst.msk [vmem:[#allocation8] sm:$0xf] %vm137, %v133
      %139 = vst.msk [vmem:[#allocation8 + $0x4] sm:$0xf] %vm137, %v134
    $region25: #{tpu_custom_call.1} parent=1 // pred_fallthru
      _
    // Predicated region
    $region26: #{tpu_custom_call.1} parent=1 // pred_check
      _
    $region27: #{tpu_custom_call.1} parent=1 // pred_check_branch
      %141 = sbr.rel (0) target = $region29
    $region28: #{tpu_custom_call.1} parent=1 // pred_region
      %s143 = ssub.s32 128, 128
      %144 = vsyncadd [#allocation5], %s143
      %s145 = sshll.u32 [#allocation8], 4
      %s146 = int_to_ptr.vmem [resolvable:$true] %s145
      %151 = dma.vmem_to_hbm [thread:$0]  %s146, 128, %s2, [#allocation5], 64, 64, 4
    $region29: #{tpu_custom_call.1} parent=1 // pred_fallthru
      _
    // Predicated region
    $region30: #{tpu_custom_call.1} parent=1 // pred_check
      _
    $region31: #{tpu_custom_call.1} parent=1 // pred_check_branch
      %153 = sbr.rel (0) target = $region33
    $region32: #{tpu_custom_call.1} parent=1 // pred_region
      %154 = dma.done [#allocation5], 128
    $region33: #{tpu_custom_call.1} parent=1 // pred_fallthru
      _
    %155 = vsyncpa [#allocation4], 1
    %156 = vsyncpa [#allocation7], 1
    %157 = vsyncpa [#allocation5], 1

</llo_original>
